<compile_context>
chip_gen: v7x
topology: tpu7x:2x2x1
jax: 0.10.0
libtpu: 0.0.40
codegen_flags: <defaults>
</compile_context>

<pallas_src>
import math
import functools

import numpy as np
import jax
import jax.numpy as jnp
from jax.experimental import pallas as pl
from jax.experimental.pallas import tpu as pltpu


def make_pe_table(d_model: int, max_seq_len: int = 100) -> jnp.ndarray:
    """Positional-encoding buffer matching the PyTorch loop exactly.

    NOTE: the cos term uses exponent 2*(i+1)/d_model — this intentionally
    reproduces the original module's (non-standard) formula.
    """
    assert d_model % 2 == 0, "make_pe_table requires an even d_model"
    pe = np.zeros((max_seq_len, d_model), dtype=np.float32)
    pos = np.arange(max_seq_len, dtype=np.float64)[:, None]           # (S, 1)
    i_even = np.arange(0, d_model, 2, dtype=np.float64)[None, :]      # (1, D/2)
    pe[:, 0::2] = np.sin(pos / 10000.0 ** (2.0 * i_even / d_model))
    pe[:, 1::2] = np.cos(pos / 10000.0 ** (2.0 * (i_even + 1.0) / d_model))
    return jnp.asarray(pe)                                            # (max_seq_len, D)


def _pe_kernel(x_ref, pe_ref, o_ref, *, scale):
    # x_ref : (tb, tc) tile of the flattened (B, S*D) input (native dtype)
    # pe_ref: (1, tc) float32 tile of the flattened positional table (row broadcast)
    x = x_ref[...].astype(jnp.float32)
    o_ref[...] = (x * scale + pe_ref[...]).astype(o_ref.dtype)


def _largest_dividing_multiple(total, step, cap):
    """Largest multiple of `step` that divides `total` and is <= cap (0 if none)."""
    best = 0
    d = step
    while d <= cap:
        if total % d == 0:
            best = d
        d += step
    return best


def _choose_tiles(B, C, itemsize, budget_bytes):
    """Pick (tb, tc) for the flattened (B, C) problem. tc == C -> lane axis untiled."""
    row_bytes = C * itemsize
    total_bytes = B * row_bytes

    if row_bytes <= budget_bytes:
        tc = C
        rows_cap = budget_bytes // row_bytes
        if rows_cap >= B:
            tb = B
            # Megacore: only split when the extra grid step is noise (>= 4 MiB of
            # work) and the split keeps both row blocks (8,*)-aligned and equal.
            if total_bytes >= (4 << 20) and B % 16 == 0:
                tb = B // 2
        else:
            rows_cap = max(8, (rows_cap // 8) * 8)
            tb = rows_cap
            # Prefer a row tile that divides B so the tail block is never partial.
            for cand in range(rows_cap, 7, -8):
                if B % cand == 0:
                    tb = cand
                    break
        return tb, tc

    # A single flattened row exceeds the budget: tile the lane axis as well.
    tb = B if B <= 8 else 8
    if C % 128 != 0:
        # Only the full last dim is a legal block when C is not lane-aligned;
        # bounded in practice by max_seq_len * d_model.
        return tb, C
    cap = max(128, ((budget_bytes // (tb * itemsize)) // 128) * 128)
    tc = _largest_dividing_multiple(C, 128, cap) or min(C, cap)
    return tb, tc


def positional_encoder(x: jnp.ndarray, pe_table: jnp.ndarray, d_model: int,
                       *, tile_budget_bytes: int = 3 * 1024 * 1024) -> jnp.ndarray:
    """x: (B, S, D).  Returns x * sqrt(d_model) + pe[:S], same dtype as x."""
    B, S, D = x.shape
    assert D == d_model
    assert S <= pe_table.shape[0], (
        f"seq_len={S} exceeds positional table max_seq_len={pe_table.shape[0]}")

    C = S * D
    itemsize = x.dtype.itemsize

    # Lane-dense flattened views.  pe stays float32 end-to-end (matches the
    # PyTorch f32 buffer); its read traffic is negligible because the tile is
    # VMEM-resident across the inner grid steps.
    x2 = x.reshape(B, C)
    pe2 = pe_table[:S, :].astype(jnp.float32).reshape(1, C)

    tb, tc = _choose_tiles(B, C, itemsize, tile_budget_bytes)
    gb, gc = pl.cdiv(B, tb), pl.cdiv(C, tc)

    kernel = functools.partial(_pe_kernel, scale=float(math.sqrt(d_model)))

    cost = pl.CostEstimate(
        flops=2 * B * C,
        transcendentals=0,
        bytes_accessed=2 * B * C * itemsize + S * D * 4,
    )
    cparams = pltpu.CompilerParams(
        dimension_semantics=("parallel",) * (1 if gc == 1 else 2),
        vmem_limit_bytes=32 * 1024 * 1024,
    )

    if gc == 1:
        # 1-D grid over row blocks.  The pe block index is constant, so Pallas
        # keeps it resident instead of re-DMA'ing it every step.
        grid_spec = pl.GridSpec(
            grid=(gb,),
            in_specs=[
                pl.BlockSpec((tb, C), lambda i: (i, 0)),   # x tile
                pl.BlockSpec((1, C), lambda i: (0, 0)),    # resident pe tile
            ],
            out_specs=pl.BlockSpec((tb, C), lambda i: (i, 0)),
        )
    else:
        # Column axis outermost, rows innermost: the pe block index only changes
        # with the outer (column) index, so it is not re-fetched per row step.
        grid_spec = pl.GridSpec(
            grid=(gc, gb),
            in_specs=[
                pl.BlockSpec((tb, tc), lambda j, i: (i, j)),
                pl.BlockSpec((1, tc), lambda j, i: (0, j)),
            ],
            out_specs=pl.BlockSpec((tb, tc), lambda j, i: (i, j)),
        )

    out2 = pl.pallas_call(
        kernel,
        out_shape=jax.ShapeDtypeStruct((B, C), x.dtype),
        grid_spec=grid_spec,
        compiler_params=cparams,
        cost_estimate=cost,
    )(x2, pe2)

    return out2.reshape(B, S, D)


def positional_encoder_ref(x: jnp.ndarray, pe_table: jnp.ndarray, d_model: int) -> jnp.ndarray:
    """Pure-JAX reference mirroring the kernel's dtype handling (f32 pe, f32 math)."""
    S = x.shape[1]
    pe = pe_table[:S, :].astype(jnp.float32)
    y = x.astype(jnp.float32) * math.sqrt(d_model) + pe[None, :, :]
    return y.astype(x.dtype)


if __name__ == "__main__":
    max_seq_len = 100
    key = jax.random.PRNGKey(0)
    k1, k2, k3 = jax.random.split(key, 3)

    # --- 1) f32 path at the module's small config (B=2, S=8, d_model=32): single grid step ---
    d_model, B, S = 32, 2, 8
    pe_table = make_pe_table(d_model, max_seq_len)
    x = jax.random.normal(k1, (B, S, d_model), dtype=jnp.float32)

    out = jax.block_until_ready(positional_encoder(x, pe_table, d_model))
    ref = positional_encoder_ref(x, pe_table, d_model)
    np.testing.assert_allclose(np.asarray(out), np.asarray(ref), rtol=1e-6, atol=1e-6)

    # --- 2) bf16 path (B=16, S=32, d_model=128): still one lane-dense block ---
    d2, B2, S2 = 128, 16, 32
    pe_table2 = make_pe_table(d2, max_seq_len)
    xb = jax.random.normal(k2, (B2, S2, d2), dtype=jnp.bfloat16)

    outb = jax.block_until_ready(positional_encoder(xb, pe_table2, d2))
    refb = positional_encoder_ref(xb, pe_table2, d2)
    np.testing.assert_allclose(np.asarray(outb.astype(jnp.float32)),
                               np.asarray(refb.astype(jnp.float32)),
                               rtol=2e-2, atol=2e-1)

    # --- 3) Row-tiled multi-step path (tiny budget forces tb=8, resident pe) ---
    xf = jax.random.normal(k3, (B2, S2, d2), dtype=jnp.float32)
    out3 = jax.block_until_ready(
        positional_encoder(xf, pe_table2, d2, tile_budget_bytes=64 * 1024))
    ref3 = positional_encoder_ref(xf, pe_table2, d2)
    np.testing.assert_allclose(np.asarray(out3), np.asarray(ref3), rtol=1e-6, atol=1e-6)

    # --- 4) Column-tiled path (budget below one flattened row) ---
    out4 = jax.block_until_ready(
        positional_encoder(xf, pe_table2, d2, tile_budget_bytes=8 * 1024))
    np.testing.assert_allclose(np.asarray(out4), np.asarray(ref3), rtol=1e-6, atol=1e-6)

    print("KERNEL_OK")
</pallas_src>

<mosaic_0001>
module attributes {stable_mosaic.version = 11 : i64} {
  func.func @_pe_kernel(%arg0: i32, %arg1: memref<2x256xf32, #tpu.memory_space<vmem>>, %arg2: memref<1x256xf32, #tpu.memory_space<vmem>>, %arg3: memref<2x256xf32, #tpu.memory_space<vmem>>) attributes {dimension_semantics = [#tpu.dimension_semantics<parallel>], iteration_bounds = array<i64: 1>, scalar_prefetch = 0 : i64, scratch_operands = 0 : i64, tpu.core_type = #tpu.core_type<tc>, window_params = [{transform_indices = @transform_0, window_bounds = array<i64: 2, 256>}, {pipeline_mode = #tpu.pipeline_mode<synchronous>, transform_indices = @transform_1, window_bounds = array<i64: 1, 256>}, {transform_indices = @transform_2, window_bounds = array<i64: 2, 256>}]} {
    %c0 = arith.constant 0 : index
    %c0_0 = arith.constant 0 : index
    %0 = vector.load %arg1[%c0, %c0_0] : memref<2x256xf32, #tpu.memory_space<vmem>>, vector<2x256xf32>
    %cst = arith.constant 5.65685415 : f32
    %1 = vector.broadcast %cst : f32 to vector<2x256xf32>
    %2 = arith.mulf %0, %1 : vector<2x256xf32>
    %c0_1 = arith.constant 0 : index
    %c0_2 = arith.constant 0 : index
    %3 = vector.load %arg2[%c0_1, %c0_2] : memref<1x256xf32, #tpu.memory_space<vmem>>, vector<1x256xf32>
    %4 = vector.broadcast %3 : vector<1x256xf32> to vector<2x256xf32>
    %5 = arith.addf %2, %4 : vector<2x256xf32>
    %c0_3 = arith.constant 0 : index
    %c0_4 = arith.constant 0 : index
    %6 = vector.load %arg3[%c0_3, %c0_4] : memref<2x256xf32, #tpu.memory_space<vmem>>, vector<2x256xf32>
    tpu.vector_store %arg3[%c0_3, %c0_4], %5 {strides = array<i32>} : memref<2x256xf32, #tpu.memory_space<vmem>>, vector<2x256xf32>,
    return
  }
  func.func @transform_0(%arg0: i32) -> (i32, i32) {
    %c0_i32 = arith.constant 0 : i32
    %c0_i32_0 = arith.constant 0 : i32
    return %arg0, %c0_i32 : i32, i32
  }
  func.func @transform_1(%arg0: i32) -> (i32, i32) {
    %c0_i32 = arith.constant 0 : i32
    %c0_i32_0 = arith.constant 0 : i32
    %c0_i32_1 = arith.constant 0 : i32
    return %c0_i32, %c0_i32_0 : i32, i32
  }
  func.func @transform_2(%arg0: i32) -> (i32, i32) {
    %c0_i32 = arith.constant 0 : i32
    %c0_i32_0 = arith.constant 0 : i32
    return %arg0, %c0_i32 : i32, i32
  }
}

</mosaic_0001>

<llo_original>
// kernel: tpu_custom_call.1
$region0: #{tpu_custom_call.1}
  #allocation0 [shape = 'u32[]', space=smem, size = 0x4, offset = 0x4, fixed_abs, tag = 'smem constant byte address 0x4 - core index']
  #allocation1 [shape = 'u32[144,128]{1,0:T(1,128)}', space=vmem, size = 0x12000, scoped, tag = 'internal scratch']
  %s0 = inlined_call_operand.hbm [shape: f32[2,256], index: 0, kind: input, shape index: {}]
  %s1 = inlined_call_operand.vmem [shape: f32[1,256], index: 1, kind: input, shape index: {}]
  %s2 = inlined_call_operand.hbm [shape: f32[2,256], index: 2, kind: output, shape index: {}]
  %s3 = sld [smem:[#allocation0]]
  $region22: #{tpu_custom_call.1} parent=0
    _
  %s5 = ssub.s32 1, %s3
  %s6 = scalar_select 0, %s5, %s3
  $region1: #{tpu_custom_call.1} parent=0
    #allocation2 [shape = 'u8[2048]{0}', space=vmem, size = 0x800, scoped, tag = 'input window, operand 0, single buffered']
    #allocation3 [shape = 's32[1]{0}', space=sflag, size = 0x4, scoped, tag = 'scoped memory for tpu_custom_call.1']
    #allocation4 [shape = 's32[1]{0}', space=sflag, size = 0x4, scoped, tag = 'scoped memory for tpu_custom_call.1']
    #allocation5 [shape = 'u8[2048]{0}', space=vmem, size = 0x800, scoped, tag = 'output window, operand 0, single buffered']
    %7 = vsyncpa [#allocation3], 0
    %8 = vsyncpa [#allocation4], 0
    // Predicated region
    $region2: #{tpu_custom_call.1} parent=1 // pred_check
      _
    $region3: #{tpu_custom_call.1} parent=1 // pred_check_branch
      %10 = sbr.rel (0) target = $region5
    $region4: #{tpu_custom_call.1} parent=1 // pred_region
      %s12 = ssub.s32 64, 64
      %13 = vsyncadd [#allocation3], %s12
      %s15 = sshll.u32 [#allocation2], 4
      %s16 = int_to_ptr.vmem [resolvable:$true] %s15
      %18 = dma.hbm_to_vmem [thread:$0]  %s0, 64, %s16, [#allocation3]
    $region5: #{tpu_custom_call.1} parent=1 // pred_fallthru
      _
    // Predicated region
    $region6: #{tpu_custom_call.1} parent=1 // pred_check
      _
    $region7: #{tpu_custom_call.1} parent=1 // pred_check_branch
      %20 = sbr.rel (0) target = $region9
    $region8: #{tpu_custom_call.1} parent=1 // pred_region
      _
    $region9: #{tpu_custom_call.1} parent=1 // pred_fallthru
      _
    // Predicated region
    $region10: #{tpu_custom_call.1} parent=1 // pred_check
      _
    $region11: #{tpu_custom_call.1} parent=1 // pred_check_branch
      %22 = sbr.rel (0) target = $region13
    $region12: #{tpu_custom_call.1} parent=1 // pred_region
      %23 = dma.done [#allocation3], 64
    $region13: #{tpu_custom_call.1} parent=1 // pred_fallthru
      _
    %v24 = vld [vmem:[#allocation2] sm:$0xf]
    %v25 = vmul.f32 %v24, 5.656854
    %v26 = vld [vmem:[%s1] sm:$0x3]
    %v28 = vlaneseq
    %v29 = vshrl.u32 %v28, 7
    %v30 = vsub.s32 0, %v29
    %v31 = vrot.slane %v26, %v30
    %v32 = vlaneseq
    %v33 = vshrl.u32 %v32, 7
    %v34 = vsub.s32 1, %v33
    %v35 = vrot.slane %v26, %v34
    %v36 = vcombine.low %v31, %v35
    %v38 = vunpack.c.l.s4 1983009808
    %v39 = vunpack.c.0.s8 %v38
    %v40 = vlaneseq
    %v41 = vshrl.u32 %v40, 7
    %v42 = vsub.s32 %v39, %v41
    %v43 = vrot.slane %v36, %v42
    %v45 = vadd.f32 %v25, %v43
    %46 = vst [vmem:[#allocation5] sm:$0xf] %v45
    // Predicated region
    $region14: #{tpu_custom_call.1} parent=1 // pred_check
      _
    $region15: #{tpu_custom_call.1} parent=1 // pred_check_branch
      %48 = sbr.rel (0) target = $region17
    $region16: #{tpu_custom_call.1} parent=1 // pred_region
      %s50 = ssub.s32 64, 64
      %51 = vsyncadd [#allocation4], %s50
      %s53 = sshll.u32 [#allocation5], 4
      %s54 = int_to_ptr.vmem [resolvable:$true] %s53
      %56 = dma.vmem_to_hbm [thread:$0]  %s54, 64, %s2, [#allocation4]
    $region17: #{tpu_custom_call.1} parent=1 // pred_fallthru
      _
    // Predicated region
    $region18: #{tpu_custom_call.1} parent=1 // pred_check
      _
    $region19: #{tpu_custom_call.1} parent=1 // pred_check_branch
      %58 = sbr.rel (0) target = $region21
    $region20: #{tpu_custom_call.1} parent=1 // pred_region
      %59 = dma.done [#allocation4], 64
    $region21: #{tpu_custom_call.1} parent=1 // pred_fallthru
      _
    %60 = vsyncpa [#allocation3], 1
    %61 = vsyncpa [#allocation4], 1

</llo_original>
